<compile_context>
chip_gen: v6e
topology: v6e:2x2x1
jax: 0.10.0
libtpu: 0.0.40
codegen_flags: <defaults>
</compile_context>

<pallas_src>
import functools

import jax
import jax.numpy as jnp
from jax.experimental import pallas as pl
from jax.experimental.pallas import tpu as pltpu

P = 128          # lane-padded width for every hidden channel dimension
TB_MAX = 1024    # max batch tile


def _round_up(x, m):
    return ((x + m - 1) // m) * m


def _gelu(t):
    return jax.nn.gelu(t, approximate=True)


# --------------------------------------------------------------------------- #
# Kernel: one batch tile through the fully-composed dense chain.
# --------------------------------------------------------------------------- #
def _fno_kernel(gelu_flags, x_ref, w0_ref, b0_ref, wr_ref, br_ref, out_ref):
    """x_ref: (TB, C_PAD) f32.  w0: (C_PAD, P) bf16, b0: (1, P) f32.
    wr: (L-1, P, P) bf16 stacked composed weights, br: (L-1, 1, P) f32 biases.
    gelu_flags: static tuple[bool] of length L (gelu applied after layer i)."""
    # bf16 operands -> full-rate MXU; f32 accumulation; bias/GELU kept in f32.
    h = jnp.dot(x_ref[...].astype(jnp.bfloat16), w0_ref[...],
                preferred_element_type=jnp.float32) + b0_ref[...]
    if gelu_flags[0]:
        h = _gelu(h)
    for i, g in enumerate(gelu_flags[1:]):
        h = jnp.dot(h.astype(jnp.bfloat16), wr_ref[i],
                    preferred_element_type=jnp.float32) + br_ref[i]
        if g:
            h = _gelu(h)
    out_ref[...] = h.astype(out_ref.dtype)


# --------------------------------------------------------------------------- #
# One-time parameter preparation (hoisted out of the forward hot path)
# --------------------------------------------------------------------------- #
def prepare_params(params):
    """Fuse spec+skip, compose all GELU-free adjacent linear layers, pad to 128
    lanes, cast weights to bf16, and stack into a few VMEM-resident operands."""
    c_in = int(params["lift_w1"].shape[1])
    output_size = int(params["fc_w"].shape[0])
    n_blocks = len(params["spec_w"])

    # Unfused (but spec+skip-merged) chain in (in, out) layout, f32.
    layers = [[params["lift_w1"].T.astype(jnp.float32),
               params["lift_b1"].astype(jnp.float32), True],
              [params["lift_w2"].T.astype(jnp.float32),
               params["lift_b2"].astype(jnp.float32), False]]
    for l in range(n_blocks):
        fused = (params["spec_w"][l] + params["skip_w"][l].T).astype(jnp.float32)
        layers.append([fused, params["spec_b"][l].astype(jnp.float32),
                       l < n_blocks - 1])
    layers.append([params["proj_w1"].T.astype(jnp.float32),
                   params["proj_b1"].astype(jnp.float32), True])
    layers.append([params["proj_w2"].T.astype(jnp.float32),
                   params["proj_b2"].astype(jnp.float32), False])
    layers.append([params["fc_w"].T.astype(jnp.float32),
                   params["fc_b"].astype(jnp.float32), False])

    # Left-to-right fold: whenever a layer has no GELU after it, compose the
    # next linear layer into it (W' = W_prev @ W_next, b' = b_prev @ W_next + b).
    composed = [layers[0]]
    for w, b, g in layers[1:]:
        pw, pb, pg = composed[-1]
        if not pg:
            composed[-1] = [pw @ w, pb @ w + b, g]
        else:
            composed.append([w, b, g])
    # 13 original matmuls -> 6 composed ones for n_blocks=4.

    def pad_w(w, rows):  # (in, out) -> (rows, P), zero-padded
        return jnp.zeros((rows, P), jnp.float32).at[
            : w.shape[0], : w.shape[1]].set(w)

    def pad_b(b):        # (n,) -> (1, P)
        return jnp.zeros((1, P), jnp.float32).at[0, : b.shape[0]].set(b)

    c_pad = _round_up(c_in, 8)
    w0 = pad_w(composed[0][0], c_pad).astype(jnp.bfloat16)
    b0 = pad_b(composed[0][1])
    w_rest = jnp.stack([pad_w(w, P) for w, _, _ in composed[1:]]
                       ).astype(jnp.bfloat16)
    b_rest = jnp.stack([pad_b(b) for _, b, _ in composed[1:]])
    gelu_flags = tuple(bool(g) for _, _, g in composed)

    return {
        "w0": w0, "b0": b0, "w_rest": w_rest, "b_rest": b_rest,
        "gelu_flags": gelu_flags,
        "in_channels": c_in, "c_pad": c_pad, "output_size": output_size,
    }


# --------------------------------------------------------------------------- #
# Forward wrapper
# --------------------------------------------------------------------------- #
def fno_model_forward(x, prepped):
    """x: (B, in_channels) float32 -> (B, output_size) float32."""
    B, C_in = x.shape
    c_pad = prepped["c_pad"]
    output_size = prepped["output_size"]

    # Batch tiling: big tiles to amortize per-step overhead; for medium batches
    # force >= 2 grid steps so ("parallel",) can shard over both v7x TensorCores.
    B8 = _round_up(max(B, 1), 8)
    if B8 <= 8:
        TB = 8
    elif B8 <= 2 * TB_MAX:
        TB = _round_up((B8 + 1) // 2, 8)
    else:
        TB = TB_MAX
    B_pad = _round_up(B, TB)

    # x only padded to 16 lanes (not 128) -> ~8x less input HBM traffic.
    x_pad = jnp.zeros((B_pad, c_pad), jnp.float32).at[:B, :C_in].set(
        x.astype(jnp.float32))

    def resident_spec(shape):
        nd = len(shape)  # captured by value -> no late-binding bug
        return pl.BlockSpec(shape, lambda i, _nd=nd: (0,) * _nd)

    out_pad = pl.pallas_call(
        functools.partial(_fno_kernel, prepped["gelu_flags"]),
        out_shape=jax.ShapeDtypeStruct((B_pad, P), jnp.float32),
        grid=(B_pad // TB,),
        in_specs=[
            pl.BlockSpec((TB, c_pad), lambda i: (i, 0)),   # x tiles over batch
            resident_spec(prepped["w0"].shape),             # weights stay resident
            resident_spec(prepped["b0"].shape),
            resident_spec(prepped["w_rest"].shape),
            resident_spec(prepped["b_rest"].shape),
        ],
        out_specs=pl.BlockSpec((TB, P), lambda i: (i, 0)),
        compiler_params=pltpu.CompilerParams(
            dimension_semantics=("parallel",)),
    )(x_pad, prepped["w0"], prepped["b0"],
      prepped["w_rest"], prepped["b_rest"])

    return out_pad[:B, :output_size]


# --------------------------------------------------------------------------- #
# Synthetic init (PyTorch-convention shapes) + pure-JAX f32 reference
# --------------------------------------------------------------------------- #
def init_params(key, in_channels, width, output_size, n_blocks):
    def uni(k, shape, fan_in):
        s = 1.0 / jnp.sqrt(jnp.float32(fan_in))
        return jax.random.uniform(k, shape, jnp.float32, minval=-s, maxval=s)

    lift = 2 * width  # lifting_channel_ratio = 2
    proj = 2 * width  # projection_channel_ratio = 2
    params = {"spec_w": [], "spec_b": [], "skip_w": []}

    key, k1, k2, k3, k4 = jax.random.split(key, 5)
    params["lift_w1"] = uni(k1, (lift, in_channels), in_channels)
    params["lift_b1"] = uni(k2, (lift,), in_channels)
    params["lift_w2"] = uni(k3, (width, lift), lift)
    params["lift_b2"] = uni(k4, (width,), lift)

    for _ in range(n_blocks):
        key, k1, k2, k3 = jax.random.split(key, 4)
        # Real part of the Tucker-reconstructed spectral weight at the DC mode,
        # stored (in, out); spectral conv bias per out channel; linear skip.
        params["spec_w"].append(uni(k1, (width, width), width))
        params["spec_b"].append(uni(k2, (width,), width))
        params["skip_w"].append(uni(k3, (width, width), width))

    key, k1, k2, k3, k4 = jax.random.split(key, 5)
    params["proj_w1"] = uni(k1, (proj, width), width)
    params["proj_b1"] = uni(k2, (proj,), width)
    params["proj_w2"] = uni(k3, (1, proj), proj)
    params["proj_b2"] = uni(k4, (1,), proj)

    key, k1, k2 = jax.random.split(key, 3)
    params["fc_w"] = uni(k1, (output_size, 1), 1)
    params["fc_b"] = uni(k2, (output_size,), 1)
    return params


def reference_forward(x, params):
    h = _gelu(x @ params["lift_w1"].T + params["lift_b1"])
    h = h @ params["lift_w2"].T + params["lift_b2"]
    n_blocks = len(params["spec_w"])
    for l in range(n_blocks):
        spec = h @ params["spec_w"][l] + params["spec_b"][l]
        skip = h @ params["skip_w"][l].T
        h = spec + skip
        if l < n_blocks - 1:
            h = _gelu(h)
    h = _gelu(h @ params["proj_w1"].T + params["proj_b1"])
    h = h @ params["proj_w2"].T + params["proj_b2"]
    return h @ params["fc_w"].T + params["fc_b"]


# --------------------------------------------------------------------------- #
if __name__ == "__main__":
    batch = 2
    in_channels = 10      # FNOModel hard-codes in_channels=10
    width = 32            # hidden_channels
    n_blocks = 4          # TFNO default n_layers
    output_size = 8
    resolution = 16       # unused by forward()
    # modes / rank only parameterize the spectral weights; at 1x1 resolution
    # only the DC mode contributes, so they do not appear in the kernel.

    key = jax.random.PRNGKey(0)
    key, xk = jax.random.split(key)
    x = jax.random.normal(xk, (batch, in_channels), dtype=jnp.float32)

    params = init_params(key, in_channels, width, output_size, n_blocks)
    prepped = prepare_params(params)   # one-time prep, hoisted off the hot path

    out = fno_model_forward(x, prepped)
    out = jax.block_until_ready(out)

    ref = reference_forward(x, params)
    assert out.shape == (batch, output_size)
    # Tolerance accounts for bf16 matmul inputs (f32 accumulation).
    assert jnp.allclose(out, ref, atol=2e-2, rtol=2e-2), "mismatch vs reference"

    print("KERNEL_OK")
</pallas_src>

<mosaic_0001>
module attributes {stable_mosaic.version = 11 : i64} {
  func.func @_fno_kernel(%arg0: i32, %arg1: memref<8x16xf32, #tpu.memory_space<vmem>>, %arg2: memref<16x128xbf16, #tpu.memory_space<vmem>>, %arg3: memref<1x128xf32, #tpu.memory_space<vmem>>, %arg4: memref<5x128x128xbf16, #tpu.memory_space<vmem>>, %arg5: memref<5x1x128xf32, #tpu.memory_space<vmem>>, %arg6: memref<8x128xf32, #tpu.memory_space<vmem>>) attributes {dimension_semantics = [#tpu.dimension_semantics<parallel>], iteration_bounds = array<i64: 1>, scalar_prefetch = 0 : i64, scratch_operands = 0 : i64, tpu.core_type = #tpu.core_type<tc>, window_params = [{transform_indices = @transform_0, window_bounds = array<i64: 8, 16>}, {pipeline_mode = #tpu.pipeline_mode<synchronous>, transform_indices = @transform_1, window_bounds = array<i64: 16, 128>}, {pipeline_mode = #tpu.pipeline_mode<synchronous>, transform_indices = @transform_2, window_bounds = array<i64: 1, 128>}, {pipeline_mode = #tpu.pipeline_mode<synchronous>, transform_indices = @transform_3, window_bounds = array<i64: 5, 128, 128>}, {pipeline_mode = #tpu.pipeline_mode<synchronous>, transform_indices = @transform_4, window_bounds = array<i64: 5, 1, 128>}, {transform_indices = @transform_5, window_bounds = array<i64: 8, 128>}]} {
    %c0 = arith.constant 0 : index
    %c0_0 = arith.constant 0 : index
    %0 = vector.load %arg1[%c0, %c0_0] : memref<8x16xf32, #tpu.memory_space<vmem>>, vector<8x16xf32>
    %1 = arith.truncf %0 : vector<8x16xf32> to vector<8x16xbf16>
    %c0_1 = arith.constant 0 : index
    %c0_2 = arith.constant 0 : index
    %2 = vector.load %arg2[%c0_1, %c0_2] : memref<16x128xbf16, #tpu.memory_space<vmem>>, vector<16x128xbf16>
    %cst = arith.constant dense<0.000000e+00> : vector<8x128xf32>
    %3 = tpu.matmul %1, %2, %cst {dimension_numbers = #tpu.dot_dimension_numbers<[1], [0], [0], [1], [0, 0, 1, 1], [], []>} : vector<8x16xbf16>, vector<16x128xbf16>, vector<8x128xf32> -> vector<8x128xf32>
    %c0_3 = arith.constant 0 : index
    %c0_4 = arith.constant 0 : index
    %4 = vector.load %arg3[%c0_3, %c0_4] : memref<1x128xf32, #tpu.memory_space<vmem>>, vector<1x128xf32>
    %5 = vector.broadcast %4 : vector<1x128xf32> to vector<8x128xf32>
    %6 = arith.addf %3, %5 : vector<8x128xf32>
    %7 = arith.mulf %6, %6 : vector<8x128xf32>
    %8 = arith.mulf %6, %7 : vector<8x128xf32>
    %cst_5 = arith.constant 4.471500e-02 : f32
    %9 = vector.broadcast %cst_5 : f32 to vector<8x128xf32>
    %10 = arith.mulf %9, %8 : vector<8x128xf32>
    %11 = arith.addf %6, %10 : vector<8x128xf32>
    %cst_6 = arith.constant 0.797884583 : f32
    %12 = vector.broadcast %cst_6 : f32 to vector<8x128xf32>
    %13 = arith.mulf %12, %11 : vector<8x128xf32>
    %14 = math.tanh %13 : vector<8x128xf32>
    %cst_7 = arith.constant 1.000000e+00 : f32
    %15 = vector.broadcast %cst_7 : f32 to vector<8x128xf32>
    %16 = arith.addf %15, %14 : vector<8x128xf32>
    %cst_8 = arith.constant 5.000000e-01 : f32
    %17 = vector.broadcast %cst_8 : f32 to vector<8x128xf32>
    %18 = arith.mulf %17, %16 : vector<8x128xf32>
    %19 = arith.mulf %6, %18 : vector<8x128xf32>
    %20 = arith.truncf %19 : vector<8x128xf32> to vector<8x128xbf16>
    %c0_9 = arith.constant 0 : index
    %c0_10 = arith.constant 0 : index
    %c0_11 = arith.constant 0 : index
    %21 = vector.load %arg4[%c0_9, %c0_10, %c0_11] : memref<5x128x128xbf16, #tpu.memory_space<vmem>>, vector<1x128x128xbf16>
    %22 = vector.shape_cast %21 : vector<1x128x128xbf16> to vector<128x128xbf16>
    %cst_12 = arith.constant dense<0.000000e+00> : vector<8x128xf32>
    %23 = tpu.matmul %20, %22, %cst_12 {dimension_numbers = #tpu.dot_dimension_numbers<[1], [0], [0], [1], [0, 0, 1, 1], [], []>} : vector<8x128xbf16>, vector<128x128xbf16>, vector<8x128xf32> -> vector<8x128xf32>
    %c0_13 = arith.constant 0 : index
    %c0_14 = arith.constant 0 : index
    %c0_15 = arith.constant 0 : index
    %24 = vector.load %arg5[%c0_13, %c0_14, %c0_15] : memref<5x1x128xf32, #tpu.memory_space<vmem>>, vector<1x1x128xf32>
    %25 = vector.shape_cast %24 : vector<1x1x128xf32> to vector<1x128xf32>
    %26 = vector.broadcast %25 : vector<1x128xf32> to vector<8x128xf32>
    %27 = arith.addf %23, %26 : vector<8x128xf32>
    %28 = arith.mulf %27, %27 : vector<8x128xf32>
    %29 = arith.mulf %27, %28 : vector<8x128xf32>
    %cst_16 = arith.constant 4.471500e-02 : f32
    %30 = vector.broadcast %cst_16 : f32 to vector<8x128xf32>
    %31 = arith.mulf %30, %29 : vector<8x128xf32>
    %32 = arith.addf %27, %31 : vector<8x128xf32>
    %cst_17 = arith.constant 0.797884583 : f32
    %33 = vector.broadcast %cst_17 : f32 to vector<8x128xf32>
    %34 = arith.mulf %33, %32 : vector<8x128xf32>
    %35 = math.tanh %34 : vector<8x128xf32>
    %cst_18 = arith.constant 1.000000e+00 : f32
    %36 = vector.broadcast %cst_18 : f32 to vector<8x128xf32>
    %37 = arith.addf %36, %35 : vector<8x128xf32>
    %cst_19 = arith.constant 5.000000e-01 : f32
    %38 = vector.broadcast %cst_19 : f32 to vector<8x128xf32>
    %39 = arith.mulf %38, %37 : vector<8x128xf32>
    %40 = arith.mulf %27, %39 : vector<8x128xf32>
    %41 = arith.truncf %40 : vector<8x128xf32> to vector<8x128xbf16>
    %c1 = arith.constant 1 : index
    %c0_20 = arith.constant 0 : index
    %c0_21 = arith.constant 0 : index
    %42 = vector.load %arg4[%c1, %c0_20, %c0_21] : memref<5x128x128xbf16, #tpu.memory_space<vmem>>, vector<1x128x128xbf16>
    %43 = vector.shape_cast %42 : vector<1x128x128xbf16> to vector<128x128xbf16>
    %cst_22 = arith.constant dense<0.000000e+00> : vector<8x128xf32>
    %44 = tpu.matmul %41, %43, %cst_22 {dimension_numbers = #tpu.dot_dimension_numbers<[1], [0], [0], [1], [0, 0, 1, 1], [], []>} : vector<8x128xbf16>, vector<128x128xbf16>, vector<8x128xf32> -> vector<8x128xf32>
    %c1_23 = arith.constant 1 : index
    %c0_24 = arith.constant 0 : index
    %c0_25 = arith.constant 0 : index
    %45 = vector.load %arg5[%c1_23, %c0_24, %c0_25] : memref<5x1x128xf32, #tpu.memory_space<vmem>>, vector<1x1x128xf32>
    %46 = vector.shape_cast %45 : vector<1x1x128xf32> to vector<1x128xf32>
    %47 = vector.broadcast %46 : vector<1x128xf32> to vector<8x128xf32>
    %48 = arith.addf %44, %47 : vector<8x128xf32>
    %49 = arith.mulf %48, %48 : vector<8x128xf32>
    %50 = arith.mulf %48, %49 : vector<8x128xf32>
    %cst_26 = arith.constant 4.471500e-02 : f32
    %51 = vector.broadcast %cst_26 : f32 to vector<8x128xf32>
    %52 = arith.mulf %51, %50 : vector<8x128xf32>
    %53 = arith.addf %48, %52 : vector<8x128xf32>
    %cst_27 = arith.constant 0.797884583 : f32
    %54 = vector.broadcast %cst_27 : f32 to vector<8x128xf32>
    %55 = arith.mulf %54, %53 : vector<8x128xf32>
    %56 = math.tanh %55 : vector<8x128xf32>
    %cst_28 = arith.constant 1.000000e+00 : f32
    %57 = vector.broadcast %cst_28 : f32 to vector<8x128xf32>
    %58 = arith.addf %57, %56 : vector<8x128xf32>
    %cst_29 = arith.constant 5.000000e-01 : f32
    %59 = vector.broadcast %cst_29 : f32 to vector<8x128xf32>
    %60 = arith.mulf %59, %58 : vector<8x128xf32>
    %61 = arith.mulf %48, %60 : vector<8x128xf32>
    %62 = arith.truncf %61 : vector<8x128xf32> to vector<8x128xbf16>
    %c2 = arith.constant 2 : index
    %c0_30 = arith.constant 0 : index
    %c0_31 = arith.constant 0 : index
    %63 = vector.load %arg4[%c2, %c0_30, %c0_31] : memref<5x128x128xbf16, #tpu.memory_space<vmem>>, vector<1x128x128xbf16>
    %64 = vector.shape_cast %63 : vector<1x128x128xbf16> to vector<128x128xbf16>
    %cst_32 = arith.constant dense<0.000000e+00> : vector<8x128xf32>
    %65 = tpu.matmul %62, %64, %cst_32 {dimension_numbers = #tpu.dot_dimension_numbers<[1], [0], [0], [1], [0, 0, 1, 1], [], []>} : vector<8x128xbf16>, vector<128x128xbf16>, vector<8x128xf32> -> vector<8x128xf32>
    %c2_33 = arith.constant 2 : index
    %c0_34 = arith.constant 0 : index
    %c0_35 = arith.constant 0 : index
    %66 = vector.load %arg5[%c2_33, %c0_34, %c0_35] : memref<5x1x128xf32, #tpu.memory_space<vmem>>, vector<1x1x128xf32>
    %67 = vector.shape_cast %66 : vector<1x1x128xf32> to vector<1x128xf32>
    %68 = vector.broadcast %67 : vector<1x128xf32> to vector<8x128xf32>
    %69 = arith.addf %65, %68 : vector<8x128xf32>
    %70 = arith.mulf %69, %69 : vector<8x128xf32>
    %71 = arith.mulf %69, %70 : vector<8x128xf32>
    %cst_36 = arith.constant 4.471500e-02 : f32
    %72 = vector.broadcast %cst_36 : f32 to vector<8x128xf32>
    %73 = arith.mulf %72, %71 : vector<8x128xf32>
    %74 = arith.addf %69, %73 : vector<8x128xf32>
    %cst_37 = arith.constant 0.797884583 : f32
    %75 = vector.broadcast %cst_37 : f32 to vector<8x128xf32>
    %76 = arith.mulf %75, %74 : vector<8x128xf32>
    %77 = math.tanh %76 : vector<8x128xf32>
    %cst_38 = arith.constant 1.000000e+00 : f32
    %78 = vector.broadcast %cst_38 : f32 to vector<8x128xf32>
    %79 = arith.addf %78, %77 : vector<8x128xf32>
    %cst_39 = arith.constant 5.000000e-01 : f32
    %80 = vector.broadcast %cst_39 : f32 to vector<8x128xf32>
    %81 = arith.mulf %80, %79 : vector<8x128xf32>
    %82 = arith.mulf %69, %81 : vector<8x128xf32>
    %83 = arith.truncf %82 : vector<8x128xf32> to vector<8x128xbf16>
    %c3 = arith.constant 3 : index
    %c0_40 = arith.constant 0 : index
    %c0_41 = arith.constant 0 : index
    %84 = vector.load %arg4[%c3, %c0_40, %c0_41] : memref<5x128x128xbf16, #tpu.memory_space<vmem>>, vector<1x128x128xbf16>
    %85 = vector.shape_cast %84 : vector<1x128x128xbf16> to vector<128x128xbf16>
    %cst_42 = arith.constant dense<0.000000e+00> : vector<8x128xf32>
    %86 = tpu.matmul %83, %85, %cst_42 {dimension_numbers = #tpu.dot_dimension_numbers<[1], [0], [0], [1], [0, 0, 1, 1], [], []>} : vector<8x128xbf16>, vector<128x128xbf16>, vector<8x128xf32> -> vector<8x128xf32>
    %c3_43 = arith.constant 3 : index
    %c0_44 = arith.constant 0 : index
    %c0_45 = arith.constant 0 : index
    %87 = vector.load %arg5[%c3_43, %c0_44, %c0_45] : memref<5x1x128xf32, #tpu.memory_space<vmem>>, vector<1x1x128xf32>
    %88 = vector.shape_cast %87 : vector<1x1x128xf32> to vector<1x128xf32>
    %89 = vector.broadcast %88 : vector<1x128xf32> to vector<8x128xf32>
    %90 = arith.addf %86, %89 : vector<8x128xf32>
    %91 = arith.mulf %90, %90 : vector<8x128xf32>
    %92 = arith.mulf %90, %91 : vector<8x128xf32>
    %cst_46 = arith.constant 4.471500e-02 : f32
    %93 = vector.broadcast %cst_46 : f32 to vector<8x128xf32>
    %94 = arith.mulf %93, %92 : vector<8x128xf32>
    %95 = arith.addf %90, %94 : vector<8x128xf32>
    %cst_47 = arith.constant 0.797884583 : f32
    %96 = vector.broadcast %cst_47 : f32 to vector<8x128xf32>
    %97 = arith.mulf %96, %95 : vector<8x128xf32>
    %98 = math.tanh %97 : vector<8x128xf32>
    %cst_48 = arith.constant 1.000000e+00 : f32
    %99 = vector.broadcast %cst_48 : f32 to vector<8x128xf32>
    %100 = arith.addf %99, %98 : vector<8x128xf32>
    %cst_49 = arith.constant 5.000000e-01 : f32
    %101 = vector.broadcast %cst_49 : f32 to vector<8x128xf32>
    %102 = arith.mulf %101, %100 : vector<8x128xf32>
    %103 = arith.mulf %90, %102 : vector<8x128xf32>
    %104 = arith.truncf %103 : vector<8x128xf32> to vector<8x128xbf16>
    %c4 = arith.constant 4 : index
    %c0_50 = arith.constant 0 : index
    %c0_51 = arith.constant 0 : index
    %105 = vector.load %arg4[%c4, %c0_50, %c0_51] : memref<5x128x128xbf16, #tpu.memory_space<vmem>>, vector<1x128x128xbf16>
    %106 = vector.shape_cast %105 : vector<1x128x128xbf16> to vector<128x128xbf16>
    %cst_52 = arith.constant dense<0.000000e+00> : vector<8x128xf32>
    %107 = tpu.matmul %104, %106, %cst_52 {dimension_numbers = #tpu.dot_dimension_numbers<[1], [0], [0], [1], [0, 0, 1, 1], [], []>} : vector<8x128xbf16>, vector<128x128xbf16>, vector<8x128xf32> -> vector<8x128xf32>
    %c4_53 = arith.constant 4 : index
    %c0_54 = arith.constant 0 : index
    %c0_55 = arith.constant 0 : index
    %108 = vector.load %arg5[%c4_53, %c0_54, %c0_55] : memref<5x1x128xf32, #tpu.memory_space<vmem>>, vector<1x1x128xf32>
    %109 = vector.shape_cast %108 : vector<1x1x128xf32> to vector<1x128xf32>
    %110 = vector.broadcast %109 : vector<1x128xf32> to vector<8x128xf32>
    %111 = arith.addf %107, %110 : vector<8x128xf32>
    %c0_56 = arith.constant 0 : index
    %c0_57 = arith.constant 0 : index
    %112 = vector.load %arg6[%c0_56, %c0_57] : memref<8x128xf32, #tpu.memory_space<vmem>>, vector<8x128xf32>
    tpu.vector_store %arg6[%c0_56, %c0_57], %111 {strides = array<i32>} : memref<8x128xf32, #tpu.memory_space<vmem>>, vector<8x128xf32>,
    return
  }
  func.func @transform_0(%arg0: i32) -> (i32, i32) {
    %c0_i32 = arith.constant 0 : i32
    %c0_i32_0 = arith.constant 0 : i32
    return %arg0, %c0_i32 : i32, i32
  }
  func.func @transform_1(%arg0: i32) -> (i32, i32) {
    %c0_i32 = arith.constant 0 : i32
    %c0_i32_0 = arith.constant 0 : i32
    %c0_i32_1 = arith.constant 0 : i32
    return %c0_i32, %c0_i32_0 : i32, i32
  }
  func.func @transform_2(%arg0: i32) -> (i32, i32) {
    %c0_i32 = arith.constant 0 : i32
    %c0_i32_0 = arith.constant 0 : i32
    %c0_i32_1 = arith.constant 0 : i32
    return %c0_i32, %c0_i32_0 : i32, i32
  }
  func.func @transform_3(%arg0: i32) -> (i32, i32, i32) {
    %c0_i32 = arith.constant 0 : i32
    %c0_i32_0 = arith.constant 0 : i32
    %c0_i32_1 = arith.constant 0 : i32
    %c0_i32_2 = arith.constant 0 : i32
    return %c0_i32, %c0_i32_0, %c0_i32_1 : i32, i32, i32
  }
  func.func @transform_4(%arg0: i32) -> (i32, i32, i32) {
    %c0_i32 = arith.constant 0 : i32
    %c0_i32_0 = arith.constant 0 : i32
    %c0_i32_1 = arith.constant 0 : i32
    %c0_i32_2 = arith.constant 0 : i32
    return %c0_i32, %c0_i32_0, %c0_i32_1 : i32, i32, i32
  }
  func.func @transform_5(%arg0: i32) -> (i32, i32) {
    %c0_i32 = arith.constant 0 : i32
    %c0_i32_0 = arith.constant 0 : i32
    return %arg0, %c0_i32 : i32, i32
  }
}

</mosaic_0001>

<llo_original>
// kernel: tpu_custom_call.1
$region0: #{tpu_custom_call.1}
  #allocation0 [shape = 'u32[]', space=smem, size = 0x4, offset = 0x4, fixed_abs, tag = 'smem constant byte address 0x4 - core index']
  #allocation1 [shape = 'u32[144,128]{1,0:T(1,128)}', space=vmem, size = 0x12000, scoped, tag = 'internal scratch']
  %s0 = inlined_call_operand.hbm [shape: f32[8,16], index: 0, kind: input, shape index: {}]
  %s1 = inlined_call_operand.hbm [shape: bf16[16,128], index: 1, kind: input, shape index: {}]
  %s2 = inlined_call_operand.vmem [shape: f32[1,128], index: 2, kind: input, shape index: {}]
  %s3 = inlined_call_operand.hbm [shape: bf16[5,128,128], index: 3, kind: input, shape index: {}]
  %s4 = inlined_call_operand.vmem [shape: f32[5,1,128], index: 4, kind: input, shape index: {}]
  %s5 = inlined_call_operand.hbm [shape: f32[8,128], index: 5, kind: output, shape index: {}]
  %s6 = sld [smem:[#allocation0]]
  $region42: #{tpu_custom_call.1} parent=0
    _
  %s8 = ssub.s32 1, %s6
  %s9 = scalar_select 0, %s8, %s6
  $region1: #{tpu_custom_call.1} parent=0
    #allocation2 [shape = 'u8[4096]{0}', space=vmem, size = 0x1000, scoped, tag = 'input window, operand 0, single buffered']
    #allocation3 [shape = 's32[1]{0}', space=sflag, size = 0x4, scoped, tag = 'scoped memory for tpu_custom_call.1']
    #allocation4 [shape = 's32[1]{0}', space=sflag, size = 0x4, scoped, tag = 'scoped memory for tpu_custom_call.1']
    #allocation5 [shape = 'u8[4096]{0}', space=vmem, size = 0x1000, scoped, tag = 'input window, operand 1, single buffered']
    #allocation6 [shape = 's32[1]{0}', space=sflag, size = 0x4, scoped, tag = 'scoped memory for tpu_custom_call.1']
    #allocation7 [shape = 'u8[163840]{0}', space=vmem, size = 0x28000, scoped, tag = 'input window, operand 3, single buffered']
    #allocation8 [shape = 'u8[4096]{0}', space=vmem, size = 0x1000, scoped, tag = 'output window, operand 0, single buffered']
    %10 = vsyncpa [#allocation3], 0
    %11 = vsyncpa [#allocation6], 0
    %12 = vsyncpa [#allocation4], 0
    // Predicated region
    $region2: #{tpu_custom_call.1} parent=1 // pred_check
      _
    $region3: #{tpu_custom_call.1} parent=1 // pred_check_branch
      %14 = sbr.rel (0) target = $region5
    $region4: #{tpu_custom_call.1} parent=1 // pred_region
      %s16 = ssub.s32 128, 128
      %17 = vsyncadd [#allocation3], %s16
      %s19 = sshll.u32 [#allocation2], 4
      %s20 = int_to_ptr.vmem [resolvable:$true] %s19
      %22 = dma.hbm_to_vmem [thread:$0]  %s0, 128, %s20, [#allocation3]
    $region5: #{tpu_custom_call.1} parent=1 // pred_fallthru
      _
    // Predicated region
    $region6: #{tpu_custom_call.1} parent=1 // pred_check
      _
    $region7: #{tpu_custom_call.1} parent=1 // pred_check_branch
      %24 = sbr.rel (0) target = $region9
    $region8: #{tpu_custom_call.1} parent=1 // pred_region
      %s26 = ssub.s32 128, 128
      %27 = vsyncadd [#allocation6], %s26
      %s28 = sshll.u32 [#allocation5], 4
      %s29 = int_to_ptr.vmem [resolvable:$true] %s28
      %34 = dma.hbm_to_vmem [thread:$0]  %s1, 128, %s29, [#allocation6], 64, 64, 4
    $region9: #{tpu_custom_call.1} parent=1 // pred_fallthru
      _
    // Predicated region
    $region10: #{tpu_custom_call.1} parent=1 // pred_check
      _
    $region11: #{tpu_custom_call.1} parent=1 // pred_check_branch
      %36 = sbr.rel (0) target = $region13
    $region12: #{tpu_custom_call.1} parent=1 // pred_region
      _
    $region13: #{tpu_custom_call.1} parent=1 // pred_fallthru
      _
    // Predicated region
    $region14: #{tpu_custom_call.1} parent=1 // pred_check
      _
    $region15: #{tpu_custom_call.1} parent=1 // pred_check_branch
      %38 = sbr.rel (0) target = $region17
    $region16: #{tpu_custom_call.1} parent=1 // pred_region
      %s40 = ssub.s32 5120, 5120
      %41 = vsyncadd [#allocation6], %s40
      %s42 = sshll.u32 [#allocation7], 4
      %s43 = int_to_ptr.vmem [resolvable:$true] %s42
      %48 = dma.hbm_to_vmem [thread:$0]  %s3, 5120, %s43, [#allocation6], 64, 64, 4
    $region17: #{tpu_custom_call.1} parent=1 // pred_fallthru
      _
    // Predicated region
    $region18: #{tpu_custom_call.1} parent=1 // pred_check
      _
    $region19: #{tpu_custom_call.1} parent=1 // pred_check_branch
      %50 = sbr.rel (0) target = $region21
    $region20: #{tpu_custom_call.1} parent=1 // pred_region
      _
    $region21: #{tpu_custom_call.1} parent=1 // pred_fallthru
      _
    // Predicated region
    $region22: #{tpu_custom_call.1} parent=1 // pred_check
      _
    $region23: #{tpu_custom_call.1} parent=1 // pred_check_branch
      %52 = sbr.rel (0) target = $region25
    $region24: #{tpu_custom_call.1} parent=1 // pred_region
      %53 = dma.done [#allocation3], 128
    $region25: #{tpu_custom_call.1} parent=1 // pred_fallthru
      _
    // Predicated region
    $region26: #{tpu_custom_call.1} parent=1 // pred_check
      _
    $region27: #{tpu_custom_call.1} parent=1 // pred_check_branch
      %55 = sbr.rel (0) target = $region29
    $region28: #{tpu_custom_call.1} parent=1 // pred_region
      %56 = dma.done [#allocation6], 128
    $region29: #{tpu_custom_call.1} parent=1 // pred_fallthru
      _
    // Predicated region
    $region30: #{tpu_custom_call.1} parent=1 // pred_check
      _
    $region31: #{tpu_custom_call.1} parent=1 // pred_check_branch
      %58 = sbr.rel (0) target = $region33
    $region32: #{tpu_custom_call.1} parent=1 // pred_region
      %59 = dma.done [#allocation6], 5120
    $region33: #{tpu_custom_call.1} parent=1 // pred_fallthru
      _
    %v61 = vld [vmem:[#allocation2] sm:$0xff]
    %v62 = vpack.c.bf16 %v61, %v61
    %v63 = vld [vmem:[#allocation5] sm:$0xf]
    %v64 = vld [vmem:[#allocation5 + $0x4] sm:$0xf]
    %v65 = vld [vmem:[%s2] sm:$0x1]
    %v67 = vlaneseq
    %v68 = vshrl.u32 %v67, 7
    %v69 = vsub.s32 0, %v68
    %v70 = vrot.slane %v65, %v69
    %v74 = vunpack.c.l.b16 %v63
    %v75 = vunpack.c.l.b16 %v64
    %v76 = vpack.c.b16 %v75, %v74
    %vm78 = vcmask 130048
    %v80 = vsel %vm78, %v62, 0
    %82 = vmatprep.subr.bf16.mxu0 0
    %83 = vmatpush1.bf16.msra.mxu0 0
    %84 = vmatprep.subr.bf16.mxu0 0
    %85 = vmatpush1.bf16.msra.mxu0 0
    %86 = vmatprep.subr.bf16.mxu0 0
    %87 = vmatpush1.bf16.msra.mxu0 0
    %88 = vmatprep.subr.bf16.mxu0 0
    %89 = vmatpush1.bf16.msra.mxu0 0
    %90 = vmatprep.subr.bf16.mxu0 0
    %91 = vmatpush1.bf16.msra.mxu0 0
    %92 = vmatprep.subr.bf16.mxu0 0
    %93 = vmatpush1.bf16.msra.mxu0 0
    %94 = vmatprep.subr.bf16.mxu0 0
    %95 = vmatpush1.bf16.msra.mxu0 0
    %96 = vmatprep.subr.bf16.mxu0 0
    %97 = vmatpush1.bf16.msra.mxu0 %v76
    %98 = vmatprep.subr.bf16.mxu0 0
    %99 = vmatpush2.bf16.msra.mxu0 0
    %100 = vmatprep.subr.bf16.mxu0 0
    %101 = vmatpush2.bf16.msra.mxu0 0
    %102 = vmatprep.subr.bf16.mxu0 0
    %103 = vmatpush2.bf16.msra.mxu0 0
    %104 = vmatprep.subr.bf16.mxu0 0
    %105 = vmatpush2.bf16.msra.mxu0 0
    %106 = vmatprep.subr.bf16.mxu0 0
    %107 = vmatpush2.bf16.msra.mxu0 0
    %108 = vmatprep.subr.bf16.mxu0 0
    %109 = vmatpush2.bf16.msra.mxu0 0
    %110 = vmatprep.subr.bf16.mxu0 0
    %111 = vmatpush2.bf16.msra.mxu0 0
    %112 = vmatprep.subr.bf16.mxu0 0
    %113 = vmatpush2.bf16.msra.mxu0 0
    %114 = vmatprep.mubr.bf16.mxu0 0
    %115 = vmatmul.mubr.bf16.gmra.mxu0 %v80
    %v116 = vpop.f32.mrf.mxu0
    %v117 = vadd.f32 %v70, %v116
    %v118 = vpop.f32.mrf.mxu0
    %v119 = vpop.f32.mrf.mxu0
    %v120 = vpop.f32.mrf.mxu0
    %121 = vdwg.mxu0
    %v122 = vmul.f32 %v117, %v117
    %v123 = vmul.f32 %v117, %v122
    %v124 = vmul.f32 %v123, 0.044715
    %v125 = vadd.f32 %v117, %v124
    %v126 = vmul.f32 %v125, 0.7978846
    %v127 = vtanh.pop %v126
    %v128 = vadd.f32 %v127, 1.0
    %v129 = vmul.f32 %v128, 0.5
    %v130 = vmul.f32 %v117, %v129
    %v131 = vpack.c.bf16 %v130, %v130
    %v132 = vld [vmem:[#allocation7] sm:$0xf]
    %v133 = vld [vmem:[#allocation7 + $0x4] sm:$0xf]
    %v134 = vld [vmem:[#allocation7 + $0x8] sm:$0xf]
    %v135 = vld [vmem:[#allocation7 + $0xc] sm:$0xf]
    %v136 = vld [vmem:[#allocation7 + $0x10] sm:$0xf]
    %v137 = vld [vmem:[#allocation7 + $0x14] sm:$0xf]
    %v138 = vld [vmem:[#allocation7 + $0x18] sm:$0xf]
    %v139 = vld [vmem:[#allocation7 + $0x1c] sm:$0xf]
    %v140 = vld [vmem:[#allocation7 + $0x20] sm:$0xf]
    %v141 = vld [vmem:[#allocation7 + $0x24] sm:$0xf]
    %v142 = vld [vmem:[#allocation7 + $0x28] sm:$0xf]
    %v143 = vld [vmem:[#allocation7 + $0x2c] sm:$0xf]
    %v144 = vld [vmem:[#allocation7 + $0x30] sm:$0xf]
    %v145 = vld [vmem:[#allocation7 + $0x34] sm:$0xf]
    %v146 = vld [vmem:[#allocation7 + $0x38] sm:$0xf]
    %v147 = vld [vmem:[#allocation7 + $0x3c] sm:$0xf]
    %v148 = vld [vmem:[%s4] sm:$0x1]
    %v150 = vlaneseq
    %v151 = vshrl.u32 %v150, 7
    %v152 = vsub.s32 0, %v151
    %v153 = vrot.slane %v148, %v152
    %v171 = vunpack.c.l.b16 %v132
    %v172 = vunpack.c.l.b16 %v133
    %v173 = vunpack.c.l.b16 %v134
    %v174 = vunpack.c.l.b16 %v135
    %v175 = vunpack.c.l.b16 %v136
    %v176 = vunpack.c.l.b16 %v137
    %v177 = vunpack.c.l.b16 %v138
    %v178 = vunpack.c.l.b16 %v139
    %v179 = vunpack.c.l.b16 %v140
    %v180 = vunpack.c.l.b16 %v141
    %v181 = vunpack.c.l.b16 %v142
    %v182 = vunpack.c.l.b16 %v143
    %v183 = vunpack.c.l.b16 %v144
    %v184 = vunpack.c.l.b16 %v145
    %v185 = vunpack.c.l.b16 %v146
    %v186 = vunpack.c.l.b16 %v147
    %v187 = vpack.c.b16 %v172, %v171
    %v188 = vpack.c.b16 %v174, %v173
    %v189 = vpack.c.b16 %v176, %v175
    %v190 = vpack.c.b16 %v178, %v177
    %v191 = vpack.c.b16 %v180, %v179
    %v192 = vpack.c.b16 %v182, %v181
    %v193 = vpack.c.b16 %v184, %v183
    %v194 = vpack.c.b16 %v186, %v185
    %203 = vmatprep.subr.bf16.mxu0 0
    %204 = vmatpush1.bf16.msra.mxu0 %v194
    %205 = vmatprep.subr.bf16.mxu0 0
    %206 = vmatpush1.bf16.msra.mxu0 %v193
    %207 = vmatprep.subr.bf16.mxu0 0
    %208 = vmatpush1.bf16.msra.mxu0 %v192
    %209 = vmatprep.subr.bf16.mxu0 0
    %210 = vmatpush1.bf16.msra.mxu0 %v191
    %211 = vmatprep.subr.bf16.mxu0 0
    %212 = vmatpush1.bf16.msra.mxu0 %v190
    %213 = vmatprep.subr.bf16.mxu0 0
    %214 = vmatpush1.bf16.msra.mxu0 %v189
    %215 = vmatprep.subr.bf16.mxu0 0
    %216 = vmatpush1.bf16.msra.mxu0 %v188
    %217 = vmatprep.subr.bf16.mxu0 0
    %218 = vmatpush1.bf16.msra.mxu0 %v187
    %219 = vmatprep.subr.bf16.mxu0 0
    %220 = vmatpush2.bf16.msra.mxu0 0
    %221 = vmatprep.subr.bf16.mxu0 0
    %222 = vmatpush2.bf16.msra.mxu0 0
    %223 = vmatprep.subr.bf16.mxu0 0
    %224 = vmatpush2.bf16.msra.mxu0 0
    %225 = vmatprep.subr.bf16.mxu0 0
    %226 = vmatpush2.bf16.msra.mxu0 0
    %227 = vmatprep.subr.bf16.mxu0 0
    %228 = vmatpush2.bf16.msra.mxu0 0
    %229 = vmatprep.subr.bf16.mxu0 0
    %230 = vmatpush2.bf16.msra.mxu0 0
    %231 = vmatprep.subr.bf16.mxu0 0
    %232 = vmatpush2.bf16.msra.mxu0 0
    %233 = vmatprep.subr.bf16.mxu0 0
    %234 = vmatpush2.bf16.msra.mxu0 0
    %235 = vmatprep.mubr.bf16.mxu0 0
    %236 = vmatmul.mubr.bf16.gmra.mxu0 %v131
    %v237 = vpop.f32.mrf.mxu0
    %v238 = vadd.f32 %v153, %v237
    %v239 = vpop.f32.mrf.mxu0
    %v240 = vpop.f32.mrf.mxu0
    %v241 = vpop.f32.mrf.mxu0
    %242 = vdwg.mxu0
    %v243 = vmul.f32 %v238, %v238
    %v244 = vmul.f32 %v238, %v243
    %v245 = vmul.f32 %v244, 0.044715
    %v246 = vadd.f32 %v238, %v245
    %v247 = vmul.f32 %v246, 0.7978846
    %v248 = vtanh.pop %v247
    %v249 = vadd.f32 %v248, 1.0
    %v250 = vmul.f32 %v249, 0.5
    %v251 = vmul.f32 %v238, %v250
    %v252 = vpack.c.bf16 %v251, %v251
    %s253 = scalar_lea.vmem [#allocation7], 64
    %v254 = vld [vmem:[%s253] sm:$0xf]
    %v255 = vld [vmem:[%s253 + $0x4] sm:$0xf]
    %v256 = vld [vmem:[%s253 + $0x8] sm:$0xf]
    %v257 = vld [vmem:[%s253 + $0xc] sm:$0xf]
    %v258 = vld [vmem:[%s253 + $0x10] sm:$0xf]
    %v259 = vld [vmem:[%s253 + $0x14] sm:$0xf]
    %v260 = vld [vmem:[%s253 + $0x18] sm:$0xf]
    %v261 = vld [vmem:[%s253 + $0x1c] sm:$0xf]
    %v262 = vld [vmem:[%s253 + $0x20] sm:$0xf]
    %v263 = vld [vmem:[%s253 + $0x24] sm:$0xf]
    %v264 = vld [vmem:[%s253 + $0x28] sm:$0xf]
    %v265 = vld [vmem:[%s253 + $0x2c] sm:$0xf]
    %v266 = vld [vmem:[%s253 + $0x30] sm:$0xf]
    %v267 = vld [vmem:[%s253 + $0x34] sm:$0xf]
    %v268 = vld [vmem:[%s253 + $0x38] sm:$0xf]
    %v269 = vld [vmem:[%s253 + $0x3c] sm:$0xf]
    %s270 = scalar_lea.vmem %s4, 1
    %v271 = vld [vmem:[%s270] sm:$0x1]
    %v273 = vlaneseq
    %v274 = vshrl.u32 %v273, 7
    %v275 = vsub.s32 0, %v274
    %v276 = vrot.slane %v271, %v275
    %v294 = vunpack.c.l.b16 %v254
    %v295 = vunpack.c.l.b16 %v255
    %v296 = vunpack.c.l.b16 %v256
    %v297 = vunpack.c.l.b16 %v257
    %v298 = vunpack.c.l.b16 %v258
    %v299 = vunpack.c.l.b16 %v259
    %v300 = vunpack.c.l.b16 %v260
    %v301 = vunpack.c.l.b16 %v261
    %v302 = vunpack.c.l.b16 %v262
    %v303 = vunpack.c.l.b16 %v263
    %v304 = vunpack.c.l.b16 %v264
    %v305 = vunpack.c.l.b16 %v265
    %v306 = vunpack.c.l.b16 %v266
    %v307 = vunpack.c.l.b16 %v267
    %v308 = vunpack.c.l.b16 %v268
    %v309 = vunpack.c.l.b16 %v269
    %v310 = vpack.c.b16 %v295, %v294
    %v311 = vpack.c.b16 %v297, %v296
    %v312 = vpack.c.b16 %v299, %v298
    %v313 = vpack.c.b16 %v301, %v300
    %v314 = vpack.c.b16 %v303, %v302
    %v315 = vpack.c.b16 %v305, %v304
    %v316 = vpack.c.b16 %v307, %v306
    %v317 = vpack.c.b16 %v309, %v308
    %326 = vmatprep.subr.bf16.mxu0 0
    %327 = vmatpush1.bf16.msra.mxu0 %v317
    %328 = vmatprep.subr.bf16.mxu0 0
    %329 = vmatpush1.bf16.msra.mxu0 %v316
    %330 = vmatprep.subr.bf16.mxu0 0
    %331 = vmatpush1.bf16.msra.mxu0 %v315
    %332 = vmatprep.subr.bf16.mxu0 0
    %333 = vmatpush1.bf16.msra.mxu0 %v314
    %334 = vmatprep.subr.bf16.mxu0 0
    %335 = vmatpush1.bf16.msra.mxu0 %v313
    %336 = vmatprep.subr.bf16.mxu0 0
    %337 = vmatpush1.bf16.msra.mxu0 %v312
    %338 = vmatprep.subr.bf16.mxu0 0
    %339 = vmatpush1.bf16.msra.mxu0 %v311
    %340 = vmatprep.subr.bf16.mxu0 0
    %341 = vmatpush1.bf16.msra.mxu0 %v310
    %342 = vmatprep.subr.bf16.mxu0 0
    %343 = vmatpush2.bf16.msra.mxu0 0
    %344 = vmatprep.subr.bf16.mxu0 0
    %345 = vmatpush2.bf16.msra.mxu0 0
    %346 = vmatprep.subr.bf16.mxu0 0
    %347 = vmatpush2.bf16.msra.mxu0 0
    %348 = vmatprep.subr.bf16.mxu0 0
    %349 = vmatpush2.bf16.msra.mxu0 0
    %350 = vmatprep.subr.bf16.mxu0 0
    %351 = vmatpush2.bf16.msra.mxu0 0
    %352 = vmatprep.subr.bf16.mxu0 0
    %353 = vmatpush2.bf16.msra.mxu0 0
    %354 = vmatprep.subr.bf16.mxu0 0
    %355 = vmatpush2.bf16.msra.mxu0 0
    %356 = vmatprep.subr.bf16.mxu0 0
    %357 = vmatpush2.bf16.msra.mxu0 0
    %358 = vmatprep.mubr.bf16.mxu0 0
    %359 = vmatmul.mubr.bf16.gmra.mxu0 %v252
    %v360 = vpop.f32.mrf.mxu0
    %v361 = vadd.f32 %v276, %v360
    %v362 = vpop.f32.mrf.mxu0
    %v363 = vpop.f32.mrf.mxu0
    %v364 = vpop.f32.mrf.mxu0
    %365 = vdwg.mxu0
    %v366 = vmul.f32 %v361, %v361
    %v367 = vmul.f32 %v361, %v366
    %v368 = vmul.f32 %v367, 0.044715
    %v369 = vadd.f32 %v361, %v368
    %v370 = vmul.f32 %v369, 0.7978846
    %v371 = vtanh.pop %v370
    %v372 = vadd.f32 %v371, 1.0
    %v373 = vmul.f32 %v372, 0.5
    %v374 = vmul.f32 %v361, %v373
    %v375 = vpack.c.bf16 %v374, %v374
    %s376 = scalar_lea.vmem [#allocation7], 128
    %v377 = vld [vmem:[%s376] sm:$0xf]
    %v378 = vld [vmem:[%s376 + $0x4] sm:$0xf]
    %v379 = vld [vmem:[%s376 + $0x8] sm:$0xf]
    %v380 = vld [vmem:[%s376 + $0xc] sm:$0xf]
    %v381 = vld [vmem:[%s376 + $0x10] sm:$0xf]
    %v382 = vld [vmem:[%s376 + $0x14] sm:$0xf]
    %v383 = vld [vmem:[%s376 + $0x18] sm:$0xf]
    %v384 = vld [vmem:[%s376 + $0x1c] sm:$0xf]
    %v385 = vld [vmem:[%s376 + $0x20] sm:$0xf]
    %v386 = vld [vmem:[%s376 + $0x24] sm:$0xf]
    %v387 = vld [vmem:[%s376 + $0x28] sm:$0xf]
    %v388 = vld [vmem:[%s376 + $0x2c] sm:$0xf]
    %v389 = vld [vmem:[%s376 + $0x30] sm:$0xf]
    %v390 = vld [vmem:[%s376 + $0x34] sm:$0xf]
    %v391 = vld [vmem:[%s376 + $0x38] sm:$0xf]
    %v392 = vld [vmem:[%s376 + $0x3c] sm:$0xf]
    %s393 = scalar_lea.vmem %s4, 2
    %v394 = vld [vmem:[%s393] sm:$0x1]
    %v396 = vlaneseq
    %v397 = vshrl.u32 %v396, 7
    %v398 = vsub.s32 0, %v397
    %v399 = vrot.slane %v394, %v398
    %v417 = vunpack.c.l.b16 %v377
    %v418 = vunpack.c.l.b16 %v378
    %v419 = vunpack.c.l.b16 %v379
    %v420 = vunpack.c.l.b16 %v380
    %v421 = vunpack.c.l.b16 %v381
    %v422 = vunpack.c.l.b16 %v382
    %v423 = vunpack.c.l.b16 %v383
    %v424 = vunpack.c.l.b16 %v384
    %v425 = vunpack.c.l.b16 %v385
    %v426 = vunpack.c.l.b16 %v386
    %v427 = vunpack.c.l.b16 %v387
    %v428 = vunpack.c.l.b16 %v388
    %v429 = vunpack.c.l.b16 %v389
    %v430 = vunpack.c.l.b16 %v390
    %v431 = vunpack.c.l.b16 %v391
    %v432 = vunpack.c.l.b16 %v392
    %v433 = vpack.c.b16 %v418, %v417
    %v434 = vpack.c.b16 %v420, %v419
    %v435 = vpack.c.b16 %v422, %v421
    %v436 = vpack.c.b16 %v424, %v423
    %v437 = vpack.c.b16 %v426, %v425
    %v438 = vpack.c.b16 %v428, %v427
    %v439 = vpack.c.b16 %v430, %v429
    %v440 = vpack.c.b16 %v432, %v431
    %449 = vmatprep.subr.bf16.mxu0 0
    %450 = vmatpush1.bf16.msra.mxu0 %v440
    %451 = vmatprep.subr.bf16.mxu0 0
    %452 = vmatpush1.bf16.msra.mxu0 %v439
    %453 = vmatprep.subr.bf16.mxu0 0
    %454 = vmatpush1.bf16.msra.mxu0 %v438
    %455 = vmatprep.subr.bf16.mxu0 0
    %456 = vmatpush1.bf16.msra.mxu0 %v437
    %457 = vmatprep.subr.bf16.mxu0 0
    %458 = vmatpush1.bf16.msra.mxu0 %v436
    %459 = vmatprep.subr.bf16.mxu0 0
    %460 = vmatpush1.bf16.msra.mxu0 %v435
    %461 = vmatprep.subr.bf16.mxu0 0
    %462 = vmatpush1.bf16.msra.mxu0 %v434
    %463 = vmatprep.subr.bf16.mxu0 0
    %464 = vmatpush1.bf16.msra.mxu0 %v433
    %465 = vmatprep.subr.bf16.mxu0 0
    %466 = vmatpush2.bf16.msra.mxu0 0
    %467 = vmatprep.subr.bf16.mxu0 0
    %468 = vmatpush2.bf16.msra.mxu0 0
    %469 = vmatprep.subr.bf16.mxu0 0
    %470 = vmatpush2.bf16.msra.mxu0 0
    %471 = vmatprep.subr.bf16.mxu0 0
    %472 = vmatpush2.bf16.msra.mxu0 0
    %473 = vmatprep.subr.bf16.mxu0 0
    %474 = vmatpush2.bf16.msra.mxu0 0
    %475 = vmatprep.subr.bf16.mxu0 0
    %476 = vmatpush2.bf16.msra.mxu0 0
    %477 = vmatprep.subr.bf16.mxu0 0
    %478 = vmatpush2.bf16.msra.mxu0 0
    %479 = vmatprep.subr.bf16.mxu0 0
    %480 = vmatpush2.bf16.msra.mxu0 0
    %481 = vmatprep.mubr.bf16.mxu0 0
    %482 = vmatmul.mubr.bf16.gmra.mxu0 %v375
    %v483 = vpop.f32.mrf.mxu0
    %v484 = vadd.f32 %v399, %v483
    %v485 = vpop.f32.mrf.mxu0
    %v486 = vpop.f32.mrf.mxu0
    %v487 = vpop.f32.mrf.mxu0
    %488 = vdwg.mxu0
    %v489 = vmul.f32 %v484, %v484
    %v490 = vmul.f32 %v484, %v489
    %v491 = vmul.f32 %v490, 0.044715
    %v492 = vadd.f32 %v484, %v491
    %v493 = vmul.f32 %v492, 0.7978846
    %v494 = vtanh.pop %v493
    %v495 = vadd.f32 %v494, 1.0
    %v496 = vmul.f32 %v495, 0.5
    %v497 = vmul.f32 %v484, %v496
    %v498 = vpack.c.bf16 %v497, %v497
    %s499 = scalar_lea.vmem [#allocation7], 192
    %v500 = vld [vmem:[%s499] sm:$0xf]
    %v501 = vld [vmem:[%s499 + $0x4] sm:$0xf]
    %v502 = vld [vmem:[%s499 + $0x8] sm:$0xf]
    %v503 = vld [vmem:[%s499 + $0xc] sm:$0xf]
    %v504 = vld [vmem:[%s499 + $0x10] sm:$0xf]
    %v505 = vld [vmem:[%s499 + $0x14] sm:$0xf]
    %v506 = vld [vmem:[%s499 + $0x18] sm:$0xf]
    %v507 = vld [vmem:[%s499 + $0x1c] sm:$0xf]
    %v508 = vld [vmem:[%s499 + $0x20] sm:$0xf]
    %v509 = vld [vmem:[%s499 + $0x24] sm:$0xf]
    %v510 = vld [vmem:[%s499 + $0x28] sm:$0xf]
    %v511 = vld [vmem:[%s499 + $0x2c] sm:$0xf]
    %v512 = vld [vmem:[%s499 + $0x30] sm:$0xf]
    %v513 = vld [vmem:[%s499 + $0x34] sm:$0xf]
    %v514 = vld [vmem:[%s499 + $0x38] sm:$0xf]
    %v515 = vld [vmem:[%s499 + $0x3c] sm:$0xf]
    %s516 = scalar_lea.vmem %s4, 3
    %v517 = vld [vmem:[%s516] sm:$0x1]
    %v519 = vlaneseq
    %v520 = vshrl.u32 %v519, 7
    %v521 = vsub.s32 0, %v520
    %v522 = vrot.slane %v517, %v521
    %v540 = vunpack.c.l.b16 %v500
    %v541 = vunpack.c.l.b16 %v501
    %v542 = vunpack.c.l.b16 %v502
    %v543 = vunpack.c.l.b16 %v503
    %v544 = vunpack.c.l.b16 %v504
    %v545 = vunpack.c.l.b16 %v505
    %v546 = vunpack.c.l.b16 %v506
    %v547 = vunpack.c.l.b16 %v507
    %v548 = vunpack.c.l.b16 %v508
    %v549 = vunpack.c.l.b16 %v509
    %v550 = vunpack.c.l.b16 %v510
    %v551 = vunpack.c.l.b16 %v511
    %v552 = vunpack.c.l.b16 %v512
    %v553 = vunpack.c.l.b16 %v513
    %v554 = vunpack.c.l.b16 %v514
    %v555 = vunpack.c.l.b16 %v515
    %v556 = vpack.c.b16 %v541, %v540
    %v557 = vpack.c.b16 %v543, %v542
    %v558 = vpack.c.b16 %v545, %v544
    %v559 = vpack.c.b16 %v547, %v546
    %v560 = vpack.c.b16 %v549, %v548
    %v561 = vpack.c.b16 %v551, %v550
    %v562 = vpack.c.b16 %v553, %v552
    %v563 = vpack.c.b16 %v555, %v554
    %572 = vmatprep.subr.bf16.mxu0 0
    %573 = vmatpush1.bf16.msra.mxu0 %v563
    %574 = vmatprep.subr.bf16.mxu0 0
    %575 = vmatpush1.bf16.msra.mxu0 %v562
    %576 = vmatprep.subr.bf16.mxu0 0
    %577 = vmatpush1.bf16.msra.mxu0 %v561
    %578 = vmatprep.subr.bf16.mxu0 0
    %579 = vmatpush1.bf16.msra.mxu0 %v560
    %580 = vmatprep.subr.bf16.mxu0 0
    %581 = vmatpush1.bf16.msra.mxu0 %v559
    %582 = vmatprep.subr.bf16.mxu0 0
    %583 = vmatpush1.bf16.msra.mxu0 %v558
    %584 = vmatprep.subr.bf16.mxu0 0
    %585 = vmatpush1.bf16.msra.mxu0 %v557
    %586 = vmatprep.subr.bf16.mxu0 0
    %587 = vmatpush1.bf16.msra.mxu0 %v556
    %588 = vmatprep.subr.bf16.mxu0 0
    %589 = vmatpush2.bf16.msra.mxu0 0
    %590 = vmatprep.subr.bf16.mxu0 0
    %591 = vmatpush2.bf16.msra.mxu0 0
    %592 = vmatprep.subr.bf16.mxu0 0
    %593 = vmatpush2.bf16.msra.mxu0 0
    %594 = vmatprep.subr.bf16.mxu0 0
    %595 = vmatpush2.bf16.msra.mxu0 0
    %596 = vmatprep.subr.bf16.mxu0 0
    %597 = vmatpush2.bf16.msra.mxu0 0
    %598 = vmatprep.subr.bf16.mxu0 0
    %599 = vmatpush2.bf16.msra.mxu0 0
    %600 = vmatprep.subr.bf16.mxu0 0
    %601 = vmatpush2.bf16.msra.mxu0 0
    %602 = vmatprep.subr.bf16.mxu0 0
    %603 = vmatpush2.bf16.msra.mxu0 0
    %604 = vmatprep.mubr.bf16.mxu0 0
    %605 = vmatmul.mubr.bf16.gmra.mxu0 %v498
    %v606 = vpop.f32.mrf.mxu0
    %v607 = vadd.f32 %v522, %v606
    %v608 = vpop.f32.mrf.mxu0
    %v609 = vpop.f32.mrf.mxu0
    %v610 = vpop.f32.mrf.mxu0
    %611 = vdwg.mxu0
    %v612 = vmul.f32 %v607, %v607
    %v613 = vmul.f32 %v607, %v612
    %v614 = vmul.f32 %v613, 0.044715
    %v615 = vadd.f32 %v607, %v614
    %v616 = vmul.f32 %v615, 0.7978846
    %v617 = vtanh.pop %v616
    %v618 = vadd.f32 %v617, 1.0
    %v619 = vmul.f32 %v618, 0.5
    %v620 = vmul.f32 %v607, %v619
    %v621 = vpack.c.bf16 %v620, %v620
    %s622 = scalar_lea.vmem [#allocation7], 256
    %v623 = vld [vmem:[%s622] sm:$0xf]
    %v624 = vld [vmem:[%s622 + $0x4] sm:$0xf]
    %v625 = vld [vmem:[%s622 + $0x8] sm:$0xf]
    %v626 = vld [vmem:[%s622 + $0xc] sm:$0xf]
    %v627 = vld [vmem:[%s622 + $0x10] sm:$0xf]
    %v628 = vld [vmem:[%s622 + $0x14] sm:$0xf]
    %v629 = vld [vmem:[%s622 + $0x18] sm:$0xf]
    %v630 = vld [vmem:[%s622 + $0x1c] sm:$0xf]
    %v631 = vld [vmem:[%s622 + $0x20] sm:$0xf]
    %v632 = vld [vmem:[%s622 + $0x24] sm:$0xf]
    %v633 = vld [vmem:[%s622 + $0x28] sm:$0xf]
    %v634 = vld [vmem:[%s622 + $0x2c] sm:$0xf]
    %v635 = vld [vmem:[%s622 + $0x30] sm:$0xf]
    %v636 = vld [vmem:[%s622 + $0x34] sm:$0xf]
    %v637 = vld [vmem:[%s622 + $0x38] sm:$0xf]
    %v638 = vld [vmem:[%s622 + $0x3c] sm:$0xf]
    %s639 = scalar_lea.vmem %s4, 4
    %v640 = vld [vmem:[%s639] sm:$0x1]
    %v642 = vlaneseq
    %v643 = vshrl.u32 %v642, 7
    %v644 = vsub.s32 0, %v643
    %v645 = vrot.slane %v640, %v644
    %v663 = vunpack.c.l.b16 %v623
    %v664 = vunpack.c.l.b16 %v624
    %v665 = vunpack.c.l.b16 %v625
    %v666 = vunpack.c.l.b16 %v626
    %v667 = vunpack.c.l.b16 %v627
    %v668 = vunpack.c.l.b16 %v628
    %v669 = vunpack.c.l.b16 %v629
    %v670 = vunpack.c.l.b16 %v630
    %v671 = vunpack.c.l.b16 %v631
    %v672 = vunpack.c.l.b16 %v632
    %v673 = vunpack.c.l.b16 %v633
    %v674 = vunpack.c.l.b16 %v634
    %v675 = vunpack.c.l.b16 %v635
    %v676 = vunpack.c.l.b16 %v636
    %v677 = vunpack.c.l.b16 %v637
    %v678 = vunpack.c.l.b16 %v638
    %v679 = vpack.c.b16 %v664, %v663
    %v680 = vpack.c.b16 %v666, %v665
    %v681 = vpack.c.b16 %v668, %v667
    %v682 = vpack.c.b16 %v670, %v669
    %v683 = vpack.c.b16 %v672, %v671
    %v684 = vpack.c.b16 %v674, %v673
    %v685 = vpack.c.b16 %v676, %v675
    %v686 = vpack.c.b16 %v678, %v677
    %695 = vmatprep.subr.bf16.mxu0 0
    %696 = vmatpush1.bf16.msra.mxu0 %v686
    %697 = vmatprep.subr.bf16.mxu0 0
    %698 = vmatpush1.bf16.msra.mxu0 %v685
    %699 = vmatprep.subr.bf16.mxu0 0
    %700 = vmatpush1.bf16.msra.mxu0 %v684
    %701 = vmatprep.subr.bf16.mxu0 0
    %702 = vmatpush1.bf16.msra.mxu0 %v683
    %703 = vmatprep.subr.bf16.mxu0 0
    %704 = vmatpush1.bf16.msra.mxu0 %v682
    %705 = vmatprep.subr.bf16.mxu0 0
    %706 = vmatpush1.bf16.msra.mxu0 %v681
    %707 = vmatprep.subr.bf16.mxu0 0
    %708 = vmatpush1.bf16.msra.mxu0 %v680
    %709 = vmatprep.subr.bf16.mxu0 0
    %710 = vmatpush1.bf16.msra.mxu0 %v679
    %711 = vmatprep.subr.bf16.mxu0 0
    %712 = vmatpush2.bf16.msra.mxu0 0
    %713 = vmatprep.subr.bf16.mxu0 0
    %714 = vmatpush2.bf16.msra.mxu0 0
    %715 = vmatprep.subr.bf16.mxu0 0
    %716 = vmatpush2.bf16.msra.mxu0 0
    %717 = vmatprep.subr.bf16.mxu0 0
    %718 = vmatpush2.bf16.msra.mxu0 0
    %719 = vmatprep.subr.bf16.mxu0 0
    %720 = vmatpush2.bf16.msra.mxu0 0
    %721 = vmatprep.subr.bf16.mxu0 0
    %722 = vmatpush2.bf16.msra.mxu0 0
    %723 = vmatprep.subr.bf16.mxu0 0
    %724 = vmatpush2.bf16.msra.mxu0 0
    %725 = vmatprep.subr.bf16.mxu0 0
    %726 = vmatpush2.bf16.msra.mxu0 0
    %727 = vmatprep.mubr.bf16.mxu0 0
    %728 = vmatmul.mubr.bf16.gmra.mxu0 %v621
    %v729 = vpop.f32.mrf.mxu0
    %v730 = vadd.f32 %v645, %v729
    %v731 = vpop.f32.mrf.mxu0
    %v732 = vpop.f32.mrf.mxu0
    %v733 = vpop.f32.mrf.mxu0
    %734 = vdwg.mxu0
    %735 = vst [vmem:[#allocation8] sm:$0xff] %v730
    // Predicated region
    $region34: #{tpu_custom_call.1} parent=1 // pred_check
      _
    $region35: #{tpu_custom_call.1} parent=1 // pred_check_branch
      %737 = sbr.rel (0) target = $region37
    $region36: #{tpu_custom_call.1} parent=1 // pred_region
      %s739 = ssub.s32 128, 128
      %740 = vsyncadd [#allocation4], %s739
      %s742 = sshll.u32 [#allocation8], 4
      %s743 = int_to_ptr.vmem [resolvable:$true] %s742
      %745 = dma.vmem_to_hbm [thread:$0]  %s743, 128, %s5, [#allocation4]
    $region37: #{tpu_custom_call.1} parent=1 // pred_fallthru
      _
    // Predicated region
    $region38: #{tpu_custom_call.1} parent=1 // pred_check
      _
    $region39: #{tpu_custom_call.1} parent=1 // pred_check_branch
      %747 = sbr.rel (0) target = $region41
    $region40: #{tpu_custom_call.1} parent=1 // pred_region
      %748 = dma.done [#allocation4], 128
    $region41: #{tpu_custom_call.1} parent=1 // pred_fallthru
      _
    %749 = vsyncpa [#allocation3], 1
    %750 = vsyncpa [#allocation6], 1
    %751 = vsyncpa [#allocation4], 1

</llo_original>
